<compile_context>
chip_gen: v7x
topology: tpu7x:2x2x1
jax: 0.10.0
libtpu: 0.0.40
codegen_flags: <defaults>
</compile_context>

<pallas_src>
import functools

import numpy as np
import jax
import jax.numpy as jnp
from jax.experimental import pallas as pl
from jax.experimental.pallas import tpu as pltpu  # noqa: F401  (TPU backend)

LANE = 128


def _round_up(n: int, m: int) -> int:
    return ((n + m - 1) // m) * m


def _fused_dynamicnet_kernel(x_ref, w_in_ref, b_in_ref, w_mid_ref, b_mid_ref,
                             w_out_ref, b_out_ref, o_ref, *, num_middle):
    """One fused forward pass, everything resident in VMEM / vregs.

    x:      [B, Din]
    w_in:   [Din, Hp]   b_in:  [1, Hp]
    w_mid:  [Hp, Hp]    b_mid: [1, Hp]
    w_out:  [Hp, Op]    b_out: [1, Op]
    o:      [B, Op]
    (Hp, Op are 128-padded; pad columns/rows are zero so results are exact.)
    """
    x = x_ref[...]
    h = jnp.maximum(
        jnp.dot(x, w_in_ref[...], preferred_element_type=jnp.float32)
        + b_in_ref[...],
        0.0,
    )
    if num_middle > 0:
        # Load the shared middle-layer weights once; reuse across the
        # statically-unrolled loop (num_middle <= 3).
        w_mid = w_mid_ref[...]
        b_mid = b_mid_ref[...]
        for _ in range(num_middle):
            h = jnp.maximum(
                jnp.dot(h, w_mid, preferred_element_type=jnp.float32) + b_mid,
                0.0,
            )
    o_ref[...] = (
        jnp.dot(h, w_out_ref[...], preferred_element_type=jnp.float32)
        + b_out_ref[...]
    ).astype(o_ref.dtype)


class DynamicNetPallas:
    """JAX/Pallas port of DynamicNet with a fully fused, jitted forward."""

    def __init__(self, depth_in, hidden_layer, depth_out, key):
        self.depth_in = depth_in
        self.hidden = hidden_layer
        self.depth_out = depth_out
        self.hidden_pad = _round_up(hidden_layer, LANE)
        self.out_pad = _round_up(depth_out, LANE)

        k = jax.random.split(key, 6)

        def _init(kw, kb, fan_in, fan_out):
            # PyTorch nn.Linear default: U(-1/sqrt(fan_in), 1/sqrt(fan_in))
            bound = 1.0 / np.sqrt(fan_in)
            w = jax.random.uniform(kw, (fan_in, fan_out), jnp.float32, -bound, bound)
            b = jax.random.uniform(kb, (fan_out,), jnp.float32, -bound, bound)
            return w, b

        # Raw (unpadded) parameters — kept for reference checking.
        self.w_in_raw, self.b_in_raw = _init(k[0], k[1], depth_in, hidden_layer)
        self.w_mid_raw, self.b_mid_raw = _init(k[2], k[3], hidden_layer, hidden_layer)
        self.w_out_raw, self.b_out_raw = _init(k[4], k[5], hidden_layer, depth_out)

        # Lane-dense (128-padded) parameters used by the kernel; pad entries are
        # zero so the math is unchanged (relu(0)=0, zero rows contribute 0).
        def _pad(w, b, rows, cols):
            wp = jnp.zeros((rows, cols), jnp.float32).at[: w.shape[0], : w.shape[1]].set(w)
            bp = jnp.zeros((1, cols), jnp.float32).at[0, : b.shape[0]].set(b)
            return wp, bp

        self.w_in, self.b_in = _pad(self.w_in_raw, self.b_in_raw,
                                    depth_in, self.hidden_pad)
        self.w_mid, self.b_mid = _pad(self.w_mid_raw, self.b_mid_raw,
                                      self.hidden_pad, self.hidden_pad)
        self.w_out, self.b_out = _pad(self.w_out_raw, self.b_out_raw,
                                      self.hidden_pad, self.out_pad)

        # One compiled forward per (num_middle, batch); num_middle in {0,1,2,3}.
        self._fwd_cache = {}

    def _make_forward(self, num_middle, batch):
        kernel = functools.partial(_fused_dynamicnet_kernel, num_middle=num_middle)
        shapes = [
            (batch, self.depth_in),             # x
            (self.depth_in, self.hidden_pad),   # w_in
            (1, self.hidden_pad),               # b_in
            (self.hidden_pad, self.hidden_pad), # w_mid
            (1, self.hidden_pad),               # b_mid
            (self.hidden_pad, self.out_pad),    # w_out
            (1, self.out_pad),                  # b_out
        ]
        # No grid: each block covers the full array; everything sits in VMEM.
        in_specs = [pl.BlockSpec(s, lambda: (0, 0)) for s in shapes]
        call = pl.pallas_call(
            kernel,
            out_shape=jax.ShapeDtypeStruct((batch, self.out_pad), jnp.float32),
            in_specs=in_specs,
            out_specs=pl.BlockSpec((batch, self.out_pad), lambda: (0, 0)),
        )
        depth_out = self.depth_out

        @jax.jit
        def fwd(x, w_in, b_in, w_mid, b_mid, w_out, b_out):
            y_pad = call(x, w_in, b_in, w_mid, b_mid, w_out, b_out)
            return y_pad[:, :depth_out]

        return fwd

    def forward(self, x, num_middle):
        num_middle = int(num_middle)
        key = (num_middle, x.shape[0])
        fwd = self._fwd_cache.get(key)
        if fwd is None:
            fwd = self._make_forward(num_middle, x.shape[0])
            self._fwd_cache[key] = fwd
        return fwd(x, self.w_in, self.b_in, self.w_mid, self.b_mid,
                   self.w_out, self.b_out)


if __name__ == "__main__":
    # Small shapes consistent with the module's forward.
    batch, depth_in, hidden, depth_out = 4, 16, 32, 8

    key = jax.random.PRNGKey(0)
    k_param, k_x = jax.random.split(key)

    net = DynamicNetPallas(depth_in, hidden, depth_out, k_param)
    x = jax.random.normal(k_x, (batch, depth_in), jnp.float32)

    # Deterministic stand-in for np.random.randint(0, 4) in the reference
    # forward (host-side Python control flow, chosen per forward pass).
    num_middle = int(np.random.default_rng(0).integers(0, 4))  # -> in {0,1,2,3}

    y = net.forward(x, num_middle)
    jax.block_until_ready(y)
    assert y.shape == (batch, depth_out)

    # Pure-JAX reference check (unpadded weights) for all 4 possible variants.
    def ref(x, nm):
        h = jnp.maximum(x @ net.w_in_raw + net.b_in_raw, 0.0)
        for _ in range(nm):
            h = jnp.maximum(h @ net.w_mid_raw + net.b_mid_raw, 0.0)
        return h @ net.w_out_raw + net.b_out_raw

    for nm in range(4):
        out = net.forward(x, nm)
        jax.block_until_ready(out)
        np.testing.assert_allclose(np.asarray(out), np.asarray(ref(x, nm)),
                                   rtol=1e-5, atol=1e-5)

    print("KERNEL_OK")
</pallas_src>

<mosaic_0001>
module attributes {stable_mosaic.version = 11 : i64} {
  func.func @_fused_dynamicnet_kernel(%arg0: memref<4x16xf32, #tpu.memory_space<vmem>>, %arg1: memref<16x128xf32, #tpu.memory_space<vmem>>, %arg2: memref<1x128xf32, #tpu.memory_space<vmem>>, %arg3: memref<128x128xf32, #tpu.memory_space<vmem>>, %arg4: memref<1x128xf32, #tpu.memory_space<vmem>>, %arg5: memref<128x128xf32, #tpu.memory_space<vmem>>, %arg6: memref<1x128xf32, #tpu.memory_space<vmem>>, %arg7: memref<4x128xf32, #tpu.memory_space<vmem>>) attributes {dimension_semantics = [], scalar_prefetch = 0 : i64, scratch_operands = 0 : i64, tpu.core_type = #tpu.core_type<tc>} {
    %c0 = arith.constant 0 : index
    %c0_0 = arith.constant 0 : index
    %0 = vector.load %arg0[%c0, %c0_0] : memref<4x16xf32, #tpu.memory_space<vmem>>, vector<4x16xf32>
    %c0_1 = arith.constant 0 : index
    %c0_2 = arith.constant 0 : index
    %1 = vector.load %arg1[%c0_1, %c0_2] : memref<16x128xf32, #tpu.memory_space<vmem>>, vector<16x128xf32>
    %cst = arith.constant dense<0.000000e+00> : vector<4x128xf32>
    %2 = tpu.matmul %0, %1, %cst {dimension_numbers = #tpu.dot_dimension_numbers<[1], [0], [0], [1], [0, 0, 1, 1], [], []>} : vector<4x16xf32>, vector<16x128xf32>, vector<4x128xf32> -> vector<4x128xf32>
    %c0_3 = arith.constant 0 : index
    %c0_4 = arith.constant 0 : index
    %3 = vector.load %arg2[%c0_3, %c0_4] : memref<1x128xf32, #tpu.memory_space<vmem>>, vector<1x128xf32>
    %4 = vector.broadcast %3 : vector<1x128xf32> to vector<4x128xf32>
    %5 = arith.addf %2, %4 : vector<4x128xf32>
    %cst_5 = arith.constant 0.000000e+00 : f32
    %6 = vector.broadcast %cst_5 : f32 to vector<4x128xf32>
    %7 = arith.maximumf %5, %6 : vector<4x128xf32>
    %c0_6 = arith.constant 0 : index
    %c0_7 = arith.constant 0 : index
    %8 = vector.load %arg3[%c0_6, %c0_7] : memref<128x128xf32, #tpu.memory_space<vmem>>, vector<128x128xf32>
    %c0_8 = arith.constant 0 : index
    %c0_9 = arith.constant 0 : index
    %9 = vector.load %arg4[%c0_8, %c0_9] : memref<1x128xf32, #tpu.memory_space<vmem>>, vector<1x128xf32>
    %cst_10 = arith.constant dense<0.000000e+00> : vector<4x128xf32>
    %10 = tpu.matmul %7, %8, %cst_10 {dimension_numbers = #tpu.dot_dimension_numbers<[1], [0], [0], [1], [0, 0, 1, 1], [], []>} : vector<4x128xf32>, vector<128x128xf32>, vector<4x128xf32> -> vector<4x128xf32>
    %11 = vector.broadcast %9 : vector<1x128xf32> to vector<4x128xf32>
    %12 = arith.addf %10, %11 : vector<4x128xf32>
    %cst_11 = arith.constant 0.000000e+00 : f32
    %13 = vector.broadcast %cst_11 : f32 to vector<4x128xf32>
    %14 = arith.maximumf %12, %13 : vector<4x128xf32>
    %cst_12 = arith.constant dense<0.000000e+00> : vector<4x128xf32>
    %15 = tpu.matmul %14, %8, %cst_12 {dimension_numbers = #tpu.dot_dimension_numbers<[1], [0], [0], [1], [0, 0, 1, 1], [], []>} : vector<4x128xf32>, vector<128x128xf32>, vector<4x128xf32> -> vector<4x128xf32>
    %16 = vector.broadcast %9 : vector<1x128xf32> to vector<4x128xf32>
    %17 = arith.addf %15, %16 : vector<4x128xf32>
    %cst_13 = arith.constant 0.000000e+00 : f32
    %18 = vector.broadcast %cst_13 : f32 to vector<4x128xf32>
    %19 = arith.maximumf %17, %18 : vector<4x128xf32>
    %cst_14 = arith.constant dense<0.000000e+00> : vector<4x128xf32>
    %20 = tpu.matmul %19, %8, %cst_14 {dimension_numbers = #tpu.dot_dimension_numbers<[1], [0], [0], [1], [0, 0, 1, 1], [], []>} : vector<4x128xf32>, vector<128x128xf32>, vector<4x128xf32> -> vector<4x128xf32>
    %21 = vector.broadcast %9 : vector<1x128xf32> to vector<4x128xf32>
    %22 = arith.addf %20, %21 : vector<4x128xf32>
    %cst_15 = arith.constant 0.000000e+00 : f32
    %23 = vector.broadcast %cst_15 : f32 to vector<4x128xf32>
    %24 = arith.maximumf %22, %23 : vector<4x128xf32>
    %c0_16 = arith.constant 0 : index
    %c0_17 = arith.constant 0 : index
    %25 = vector.load %arg5[%c0_16, %c0_17] : memref<128x128xf32, #tpu.memory_space<vmem>>, vector<128x128xf32>
    %cst_18 = arith.constant dense<0.000000e+00> : vector<4x128xf32>
    %26 = tpu.matmul %24, %25, %cst_18 {dimension_numbers = #tpu.dot_dimension_numbers<[1], [0], [0], [1], [0, 0, 1, 1], [], []>} : vector<4x128xf32>, vector<128x128xf32>, vector<4x128xf32> -> vector<4x128xf32>
    %c0_19 = arith.constant 0 : index
    %c0_20 = arith.constant 0 : index
    %27 = vector.load %arg6[%c0_19, %c0_20] : memref<1x128xf32, #tpu.memory_space<vmem>>, vector<1x128xf32>
    %28 = vector.broadcast %27 : vector<1x128xf32> to vector<4x128xf32>
    %29 = arith.addf %26, %28 : vector<4x128xf32>
    %c0_21 = arith.constant 0 : index
    %c0_22 = arith.constant 0 : index
    %30 = vector.load %arg7[%c0_21, %c0_22] : memref<4x128xf32, #tpu.memory_space<vmem>>, vector<4x128xf32>
    tpu.vector_store %arg7[%c0_21, %c0_22], %29 {strides = array<i32>} : memref<4x128xf32, #tpu.memory_space<vmem>>, vector<4x128xf32>,
    return
  }
}

</mosaic_0001>

<llo_original>
// kernel: fwd.1
$region0: #{fwd.1}
  #allocation0 [shape = 'u32[]', space=smem, size = 0x4, offset = 0x4, fixed_abs, tag = 'smem constant byte address 0x4 - core index']
  #allocation1 [shape = 'u32[144,128]{1,0:T(1,128)}', space=vmem, size = 0x12000, scoped, tag = 'internal scratch']
  %s0 = inlined_call_operand.hbm [shape: f32[4,16], index: 0, kind: input, shape index: {}]
  %s1 = inlined_call_operand.hbm [shape: f32[16,128], index: 1, kind: input, shape index: {}]
  %s2 = inlined_call_operand.vmem [shape: f32[1,128], index: 2, kind: input, shape index: {}]
  %s3 = inlined_call_operand.hbm [shape: f32[128,128], index: 3, kind: input, shape index: {}]
  %s4 = inlined_call_operand.vmem [shape: f32[1,128], index: 4, kind: input, shape index: {}]
  %s5 = inlined_call_operand.hbm [shape: f32[128,128], index: 5, kind: input, shape index: {}]
  %s6 = inlined_call_operand.vmem [shape: f32[1,128], index: 6, kind: input, shape index: {}]
  %s7 = inlined_call_operand.hbm [shape: f32[4,128], index: 7, kind: output, shape index: {}]
  %s8 = sld [smem:[#allocation0]]
  $region54: #{fwd.1} parent=0
    _
  %s10 = ssub.s32 1, %s8
  %s11 = scalar_select 0, %s10, %s8
  $region1: #{fwd.1} parent=0
    #allocation2 [shape = 'u8[2048]{0}', space=vmem, size = 0x800, scoped, tag = 'input window, operand 0, single buffered']
    #allocation3 [shape = 's32[1]{0}', space=sflag, size = 0x4, scoped, tag = 'scoped memory for fwd.1']
    #allocation4 [shape = 's32[1]{0}', space=sflag, size = 0x4, scoped, tag = 'scoped memory for fwd.1']
    #allocation5 [shape = 'u8[8192]{0}', space=vmem, size = 0x2000, scoped, tag = 'input window, operand 1, single buffered']
    #allocation6 [shape = 's32[1]{0}', space=sflag, size = 0x4, scoped, tag = 'scoped memory for fwd.1']
    #allocation7 [shape = 'u8[65536]{0}', space=vmem, size = 0x10000, scoped, tag = 'input window, operand 3, single buffered']
    #allocation8 [shape = 'u8[65536]{0}', space=vmem, size = 0x10000, scoped, tag = 'input window, operand 5, single buffered']
    #allocation9 [shape = 's32[1]{0}', space=sflag, size = 0x4, scoped, tag = 'scoped memory for fwd.1']
    #allocation10 [shape = 'u8[2048]{0}', space=vmem, size = 0x800, scoped, tag = 'output window, operand 0, single buffered']
    %12 = vsyncpa [#allocation3], 0
    %13 = vsyncpa [#allocation6], 0
    %14 = vsyncpa [#allocation9], 0
    %15 = vsyncpa [#allocation4], 0
    // Predicated region
    $region2: #{fwd.1} parent=1 // pred_check
      _
    $region3: #{fwd.1} parent=1 // pred_check_branch
      %17 = sbr.rel (0) target = $region5
    $region4: #{fwd.1} parent=1 // pred_region
      %s19 = ssub.s32 64, 64
      %20 = vsyncadd [#allocation3], %s19
      %s22 = sshll.u32 [#allocation2], 4
      %s23 = int_to_ptr.vmem [resolvable:$true] %s22
      %25 = dma.hbm_to_vmem [thread:$0]  %s0, 64, %s23, [#allocation3]
    $region5: #{fwd.1} parent=1 // pred_fallthru
      _
    // Predicated region
    $region6: #{fwd.1} parent=1 // pred_check
      _
    $region7: #{fwd.1} parent=1 // pred_check_branch
      %27 = sbr.rel (0) target = $region9
    $region8: #{fwd.1} parent=1 // pred_region
      %s29 = ssub.s32 256, 256
      %30 = vsyncadd [#allocation6], %s29
      %s31 = sshll.u32 [#allocation5], 4
      %s32 = int_to_ptr.vmem [resolvable:$true] %s31
      %37 = dma.hbm_to_vmem [thread:$0]  %s1, 256, %s32, [#allocation6], 128, 128, 8
    $region9: #{fwd.1} parent=1 // pred_fallthru
      _
    // Predicated region
    $region10: #{fwd.1} parent=1 // pred_check
      _
    $region11: #{fwd.1} parent=1 // pred_check_branch
      %39 = sbr.rel (0) target = $region13
    $region12: #{fwd.1} parent=1 // pred_region
      _
    $region13: #{fwd.1} parent=1 // pred_fallthru
      _
    // Predicated region
    $region14: #{fwd.1} parent=1 // pred_check
      _
    $region15: #{fwd.1} parent=1 // pred_check_branch
      %41 = sbr.rel (0) target = $region17
    $region16: #{fwd.1} parent=1 // pred_region
      %s43 = ssub.s32 2048, 2048
      %44 = vsyncadd [#allocation6], %s43
      %s45 = sshll.u32 [#allocation7], 4
      %s46 = int_to_ptr.vmem [resolvable:$true] %s45
      %51 = dma.hbm_to_vmem [thread:$0]  %s3, 2048, %s46, [#allocation6], 128, 128, 8
    $region17: #{fwd.1} parent=1 // pred_fallthru
      _
    // Predicated region
    $region18: #{fwd.1} parent=1 // pred_check
      _
    $region19: #{fwd.1} parent=1 // pred_check_branch
      %53 = sbr.rel (0) target = $region21
    $region20: #{fwd.1} parent=1 // pred_region
      _
    $region21: #{fwd.1} parent=1 // pred_fallthru
      _
    // Predicated region
    $region22: #{fwd.1} parent=1 // pred_check
      _
    $region23: #{fwd.1} parent=1 // pred_check_branch
      %55 = sbr.rel (0) target = $region25
    $region24: #{fwd.1} parent=1 // pred_region
      %s57 = ssub.s32 2048, 2048
      %58 = vsyncadd [#allocation9], %s57
      %s59 = sshll.u32 [#allocation8], 4
      %s60 = int_to_ptr.vmem [resolvable:$true] %s59
      %65 = dma.hbm_to_vmem [thread:$0]  %s5, 2048, %s60, [#allocation9], 128, 128, 8
    $region25: #{fwd.1} parent=1 // pred_fallthru
      _
    // Predicated region
    $region26: #{fwd.1} parent=1 // pred_check
      _
    $region27: #{fwd.1} parent=1 // pred_check_branch
      %67 = sbr.rel (0) target = $region29
    $region28: #{fwd.1} parent=1 // pred_region
      _
    $region29: #{fwd.1} parent=1 // pred_fallthru
      _
    // Predicated region
    $region30: #{fwd.1} parent=1 // pred_check
      _
    $region31: #{fwd.1} parent=1 // pred_check_branch
      %69 = sbr.rel (0) target = $region33
    $region32: #{fwd.1} parent=1 // pred_region
      %70 = dma.done [#allocation3], 64
    $region33: #{fwd.1} parent=1 // pred_fallthru
      _
    // Predicated region
    $region34: #{fwd.1} parent=1 // pred_check
      _
    $region35: #{fwd.1} parent=1 // pred_check_branch
      %72 = sbr.rel (0) target = $region37
    $region36: #{fwd.1} parent=1 // pred_region
      %73 = dma.done [#allocation6], 256
    $region37: #{fwd.1} parent=1 // pred_fallthru
      _
    // Predicated region
    $region38: #{fwd.1} parent=1 // pred_check
      _
    $region39: #{fwd.1} parent=1 // pred_check_branch
      %75 = sbr.rel (0) target = $region41
    $region40: #{fwd.1} parent=1 // pred_region
      %76 = dma.done [#allocation6], 2048
    $region41: #{fwd.1} parent=1 // pred_fallthru
      _
    // Predicated region
    $region42: #{fwd.1} parent=1 // pred_check
      _
    $region43: #{fwd.1} parent=1 // pred_check_branch
      %78 = sbr.rel (0) target = $region45
    $region44: #{fwd.1} parent=1 // pred_region
      %79 = dma.done [#allocation9], 2048
    $region45: #{fwd.1} parent=1 // pred_fallthru
      _
    %v80 = vld [vmem:[#allocation2] sm:$0xf]
    %v81 = vld [vmem:[#allocation5] sm:$0xff]
    %v82 = vld [vmem:[#allocation5 + $0x8] sm:$0xff]
    %v83 = vld [vmem:[%s2] sm:$0x1]
    %v85 = vlaneseq
    %v86 = vshrl.u32 %v85, 7
    %v87 = vsub.s32 0, %v86
    %v88 = vrot.slane %v83, %v87
    %vm90 = vcmask 130048
    %v92 = vsel %vm90, %v80, 0
    %94 = vmatprep.subr.mxu0 0.0
    %95 = vmatpush1.msra.mxu0 %v81
    %96 = vmatprep.subr.mxu0 0.0
    %97 = vmatpush1.msra.mxu0 %v82
    %98 = vmatprep.subr.mxu0 0.0
    %99 = vmatpush1.msra.mxu0 0.0
    %100 = vmatprep.subr.mxu0 0.0
    %101 = vmatpush1.msra.mxu0 0.0
    %102 = vmatprep.subr.mxu0 0.0
    %103 = vmatpush1.msra.mxu0 0.0
    %104 = vmatprep.subr.mxu0 0.0
    %105 = vmatpush1.msra.mxu0 0.0
    %106 = vmatprep.subr.mxu0 0.0
    %107 = vmatpush1.msra.mxu0 0.0
    %108 = vmatprep.subr.mxu0 0.0
    %109 = vmatpush1.msra.mxu0 0.0
    %110 = vmatprep.subr.mxu0 0.0
    %111 = vmatpush1.msra.mxu0 0.0
    %112 = vmatprep.subr.mxu0 0.0
    %113 = vmatpush1.msra.mxu0 0.0
    %114 = vmatprep.subr.mxu0 0.0
    %115 = vmatpush1.msra.mxu0 0.0
    %116 = vmatprep.subr.mxu0 0.0
    %117 = vmatpush1.msra.mxu0 0.0
    %118 = vmatprep.subr.mxu0 0.0
    %119 = vmatpush1.msra.mxu0 0.0
    %120 = vmatprep.subr.mxu0 0.0
    %121 = vmatpush1.msra.mxu0 0.0
    %122 = vmatprep.subr.mxu0 0.0
    %123 = vmatpush1.msra.mxu0 0.0
    %124 = vmatprep.subr.mxu0 0.0
    %125 = vmatpush1.msra.mxu0 0.0
    %126 = vmatprep.subr.mxu0 0.0
    %127 = vmatpush1.msra.mxu0 0.0
    %128 = vmatprep.subr.mxu0 0.0
    %129 = vmatpush1.msra.mxu0 0.0
    %130 = vmatprep.subr.mxu0 0.0
    %131 = vmatpush1.msra.mxu0 0.0
    %132 = vmatprep.subr.mxu0 0.0
    %133 = vmatpush1.msra.mxu0 0.0
    %134 = vmatprep.subr.mxu0 0.0
    %135 = vmatpush1.msra.mxu0 0.0
    %136 = vmatprep.subr.mxu0 0.0
    %137 = vmatpush1.msra.mxu0 0.0
    %138 = vmatprep.subr.mxu0 0.0
    %139 = vmatpush1.msra.mxu0 0.0
    %140 = vmatprep.subr.mxu0 0.0
    %141 = vmatpush1.msra.mxu0 0.0
    %142 = vmatprep.subr.mxu0 0.0
    %143 = vmatpush1.msra.mxu0 0.0
    %144 = vmatprep.subr.mxu0 0.0
    %145 = vmatpush1.msra.mxu0 0.0
    %146 = vmatprep.subr.mxu0 0.0
    %147 = vmatpush1.msra.mxu0 0.0
    %148 = vmatprep.subr.mxu0 0.0
    %149 = vmatpush1.msra.mxu0 0.0
    %150 = vmatprep.subr.mxu0 0.0
    %151 = vmatpush1.msra.mxu0 0.0
    %152 = vmatprep.subr.mxu0 0.0
    %153 = vmatpush1.msra.mxu0 0.0
    %154 = vmatprep.subr.mxu0 0.0
    %155 = vmatpush1.msra.mxu0 0.0
    %156 = vmatprep.subr.mxu0 0.0
    %157 = vmatpush1.msra.mxu0 0.0
    %158 = vmatprep.mubr.f32.mxu0 0.0
    %159 = vmatmul.mubr.f32.gmra.mrb[0].mxu0 %v92
    %v160 = vpop.f32.mrb[0].mxu0
    %v161 = vadd.f32 %v88, %v160
    %v162 = vpop.f32.mrb[0].mxu0
    %163 = vdwg.mxu0
    %v164 = vmax.f32 %v161, 0.0
    %v165 = vld [vmem:[#allocation7] sm:$0xff]
    %v166 = vld [vmem:[#allocation7 + $0x8] sm:$0xff]
    %v167 = vld [vmem:[#allocation7 + $0x10] sm:$0xff]
    %v168 = vld [vmem:[#allocation7 + $0x18] sm:$0xff]
    %v169 = vld [vmem:[#allocation7 + $0x20] sm:$0xff]
    %v170 = vld [vmem:[#allocation7 + $0x28] sm:$0xff]
    %v171 = vld [vmem:[#allocation7 + $0x30] sm:$0xff]
    %v172 = vld [vmem:[#allocation7 + $0x38] sm:$0xff]
    %v173 = vld [vmem:[#allocation7 + $0x40] sm:$0xff]
    %v174 = vld [vmem:[#allocation7 + $0x48] sm:$0xff]
    %v175 = vld [vmem:[#allocation7 + $0x50] sm:$0xff]
    %v176 = vld [vmem:[#allocation7 + $0x58] sm:$0xff]
    %v177 = vld [vmem:[#allocation7 + $0x60] sm:$0xff]
    %v178 = vld [vmem:[#allocation7 + $0x68] sm:$0xff]
    %v179 = vld [vmem:[#allocation7 + $0x70] sm:$0xff]
    %v180 = vld [vmem:[#allocation7 + $0x78] sm:$0xff]
    %v181 = vld [vmem:[%s4] sm:$0x1]
    %v183 = vlaneseq
    %v184 = vshrl.u32 %v183, 7
    %v185 = vsub.s32 0, %v184
    %v186 = vrot.slane %v181, %v185
    %188 = vmatprep.subr.mxu0 0.0
    %189 = vmatpush1.msra.mxu0 %v165
    %190 = vmatprep.subr.mxu0 0.0
    %191 = vmatpush1.msra.mxu0 %v166
    %192 = vmatprep.subr.mxu0 0.0
    %193 = vmatpush1.msra.mxu0 %v167
    %194 = vmatprep.subr.mxu0 0.0
    %195 = vmatpush1.msra.mxu0 %v168
    %196 = vmatprep.subr.mxu0 0.0
    %197 = vmatpush1.msra.mxu0 %v169
    %198 = vmatprep.subr.mxu0 0.0
    %199 = vmatpush1.msra.mxu0 %v170
    %200 = vmatprep.subr.mxu0 0.0
    %201 = vmatpush1.msra.mxu0 %v171
    %202 = vmatprep.subr.mxu0 0.0
    %203 = vmatpush1.msra.mxu0 %v172
    %204 = vmatprep.subr.mxu0 0.0
    %205 = vmatpush1.msra.mxu0 %v173
    %206 = vmatprep.subr.mxu0 0.0
    %207 = vmatpush1.msra.mxu0 %v174
    %208 = vmatprep.subr.mxu0 0.0
    %209 = vmatpush1.msra.mxu0 %v175
    %210 = vmatprep.subr.mxu0 0.0
    %211 = vmatpush1.msra.mxu0 %v176
    %212 = vmatprep.subr.mxu0 0.0
    %213 = vmatpush1.msra.mxu0 %v177
    %214 = vmatprep.subr.mxu0 0.0
    %215 = vmatpush1.msra.mxu0 %v178
    %216 = vmatprep.subr.mxu0 0.0
    %217 = vmatpush1.msra.mxu0 %v179
    %218 = vmatprep.subr.mxu0 0.0
    %219 = vmatpush1.msra.mxu0 %v180
    %220 = vmatprep.subr.mxu0 0.0
    %221 = vmatpush1.msra.mxu0 0.0
    %222 = vmatprep.subr.mxu0 0.0
    %223 = vmatpush1.msra.mxu0 0.0
    %224 = vmatprep.subr.mxu0 0.0
    %225 = vmatpush1.msra.mxu0 0.0
    %226 = vmatprep.subr.mxu0 0.0
    %227 = vmatpush1.msra.mxu0 0.0
    %228 = vmatprep.subr.mxu0 0.0
    %229 = vmatpush1.msra.mxu0 0.0
    %230 = vmatprep.subr.mxu0 0.0
    %231 = vmatpush1.msra.mxu0 0.0
    %232 = vmatprep.subr.mxu0 0.0
    %233 = vmatpush1.msra.mxu0 0.0
    %234 = vmatprep.subr.mxu0 0.0
    %235 = vmatpush1.msra.mxu0 0.0
    %236 = vmatprep.subr.mxu0 0.0
    %237 = vmatpush1.msra.mxu0 0.0
    %238 = vmatprep.subr.mxu0 0.0
    %239 = vmatpush1.msra.mxu0 0.0
    %240 = vmatprep.subr.mxu0 0.0
    %241 = vmatpush1.msra.mxu0 0.0
    %242 = vmatprep.subr.mxu0 0.0
    %243 = vmatpush1.msra.mxu0 0.0
    %244 = vmatprep.subr.mxu0 0.0
    %245 = vmatpush1.msra.mxu0 0.0
    %246 = vmatprep.subr.mxu0 0.0
    %247 = vmatpush1.msra.mxu0 0.0
    %248 = vmatprep.subr.mxu0 0.0
    %249 = vmatpush1.msra.mxu0 0.0
    %250 = vmatprep.subr.mxu0 0.0
    %251 = vmatpush1.msra.mxu0 0.0
    %252 = vmatprep.mubr.f32.mxu0 0.0
    %253 = vmatmul.mubr.f32.gmra.mrb[0].mxu0 %v164
    %v254 = vpop.f32.mrb[0].mxu0
    %v255 = vadd.f32 %v186, %v254
    %v256 = vpop.f32.mrb[0].mxu0
    %257 = vdwg.mxu0
    %v258 = vmax.f32 %v255, 0.0
    %259 = vmatprep.subr.mxu0 0.0
    %260 = vmatpush1.msra.mxu0 %v165
    %261 = vmatprep.subr.mxu0 0.0
    %262 = vmatpush1.msra.mxu0 %v166
    %263 = vmatprep.subr.mxu0 0.0
    %264 = vmatpush1.msra.mxu0 %v167
    %265 = vmatprep.subr.mxu0 0.0
    %266 = vmatpush1.msra.mxu0 %v168
    %267 = vmatprep.subr.mxu0 0.0
    %268 = vmatpush1.msra.mxu0 %v169
    %269 = vmatprep.subr.mxu0 0.0
    %270 = vmatpush1.msra.mxu0 %v170
    %271 = vmatprep.subr.mxu0 0.0
    %272 = vmatpush1.msra.mxu0 %v171
    %273 = vmatprep.subr.mxu0 0.0
    %274 = vmatpush1.msra.mxu0 %v172
    %275 = vmatprep.subr.mxu0 0.0
    %276 = vmatpush1.msra.mxu0 %v173
    %277 = vmatprep.subr.mxu0 0.0
    %278 = vmatpush1.msra.mxu0 %v174
    %279 = vmatprep.subr.mxu0 0.0
    %280 = vmatpush1.msra.mxu0 %v175
    %281 = vmatprep.subr.mxu0 0.0
    %282 = vmatpush1.msra.mxu0 %v176
    %283 = vmatprep.subr.mxu0 0.0
    %284 = vmatpush1.msra.mxu0 %v177
    %285 = vmatprep.subr.mxu0 0.0
    %286 = vmatpush1.msra.mxu0 %v178
    %287 = vmatprep.subr.mxu0 0.0
    %288 = vmatpush1.msra.mxu0 %v179
    %289 = vmatprep.subr.mxu0 0.0
    %290 = vmatpush1.msra.mxu0 %v180
    %291 = vmatprep.subr.mxu0 0.0
    %292 = vmatpush1.msra.mxu0 0.0
    %293 = vmatprep.subr.mxu0 0.0
    %294 = vmatpush1.msra.mxu0 0.0
    %295 = vmatprep.subr.mxu0 0.0
    %296 = vmatpush1.msra.mxu0 0.0
    %297 = vmatprep.subr.mxu0 0.0
    %298 = vmatpush1.msra.mxu0 0.0
    %299 = vmatprep.subr.mxu0 0.0
    %300 = vmatpush1.msra.mxu0 0.0
    %301 = vmatprep.subr.mxu0 0.0
    %302 = vmatpush1.msra.mxu0 0.0
    %303 = vmatprep.subr.mxu0 0.0
    %304 = vmatpush1.msra.mxu0 0.0
    %305 = vmatprep.subr.mxu0 0.0
    %306 = vmatpush1.msra.mxu0 0.0
    %307 = vmatprep.subr.mxu0 0.0
    %308 = vmatpush1.msra.mxu0 0.0
    %309 = vmatprep.subr.mxu0 0.0
    %310 = vmatpush1.msra.mxu0 0.0
    %311 = vmatprep.subr.mxu0 0.0
    %312 = vmatpush1.msra.mxu0 0.0
    %313 = vmatprep.subr.mxu0 0.0
    %314 = vmatpush1.msra.mxu0 0.0
    %315 = vmatprep.subr.mxu0 0.0
    %316 = vmatpush1.msra.mxu0 0.0
    %317 = vmatprep.subr.mxu0 0.0
    %318 = vmatpush1.msra.mxu0 0.0
    %319 = vmatprep.subr.mxu0 0.0
    %320 = vmatpush1.msra.mxu0 0.0
    %321 = vmatprep.subr.mxu0 0.0
    %322 = vmatpush1.msra.mxu0 0.0
    %323 = vmatprep.mubr.f32.mxu0 0.0
    %324 = vmatmul.mubr.f32.gmra.mrb[0].mxu0 %v258
    %v325 = vpop.f32.mrb[0].mxu0
    %v326 = vadd.f32 %v186, %v325
    %v327 = vpop.f32.mrb[0].mxu0
    %328 = vdwg.mxu0
    %v329 = vmax.f32 %v326, 0.0
    %330 = vmatprep.subr.mxu0 0.0
    %331 = vmatpush1.msra.mxu0 %v165
    %332 = vmatprep.subr.mxu0 0.0
    %333 = vmatpush1.msra.mxu0 %v166
    %334 = vmatprep.subr.mxu0 0.0
    %335 = vmatpush1.msra.mxu0 %v167
    %336 = vmatprep.subr.mxu0 0.0
    %337 = vmatpush1.msra.mxu0 %v168
    %338 = vmatprep.subr.mxu0 0.0
    %339 = vmatpush1.msra.mxu0 %v169
    %340 = vmatprep.subr.mxu0 0.0
    %341 = vmatpush1.msra.mxu0 %v170
    %342 = vmatprep.subr.mxu0 0.0
    %343 = vmatpush1.msra.mxu0 %v171
    %344 = vmatprep.subr.mxu0 0.0
    %345 = vmatpush1.msra.mxu0 %v172
    %346 = vmatprep.subr.mxu0 0.0
    %347 = vmatpush1.msra.mxu0 %v173
    %348 = vmatprep.subr.mxu0 0.0
    %349 = vmatpush1.msra.mxu0 %v174
    %350 = vmatprep.subr.mxu0 0.0
    %351 = vmatpush1.msra.mxu0 %v175
    %352 = vmatprep.subr.mxu0 0.0
    %353 = vmatpush1.msra.mxu0 %v176
    %354 = vmatprep.subr.mxu0 0.0
    %355 = vmatpush1.msra.mxu0 %v177
    %356 = vmatprep.subr.mxu0 0.0
    %357 = vmatpush1.msra.mxu0 %v178
    %358 = vmatprep.subr.mxu0 0.0
    %359 = vmatpush1.msra.mxu0 %v179
    %360 = vmatprep.subr.mxu0 0.0
    %361 = vmatpush1.msra.mxu0 %v180
    %362 = vmatprep.subr.mxu0 0.0
    %363 = vmatpush1.msra.mxu0 0.0
    %364 = vmatprep.subr.mxu0 0.0
    %365 = vmatpush1.msra.mxu0 0.0
    %366 = vmatprep.subr.mxu0 0.0
    %367 = vmatpush1.msra.mxu0 0.0
    %368 = vmatprep.subr.mxu0 0.0
    %369 = vmatpush1.msra.mxu0 0.0
    %370 = vmatprep.subr.mxu0 0.0
    %371 = vmatpush1.msra.mxu0 0.0
    %372 = vmatprep.subr.mxu0 0.0
    %373 = vmatpush1.msra.mxu0 0.0
    %374 = vmatprep.subr.mxu0 0.0
    %375 = vmatpush1.msra.mxu0 0.0
    %376 = vmatprep.subr.mxu0 0.0
    %377 = vmatpush1.msra.mxu0 0.0
    %378 = vmatprep.subr.mxu0 0.0
    %379 = vmatpush1.msra.mxu0 0.0
    %380 = vmatprep.subr.mxu0 0.0
    %381 = vmatpush1.msra.mxu0 0.0
    %382 = vmatprep.subr.mxu0 0.0
    %383 = vmatpush1.msra.mxu0 0.0
    %384 = vmatprep.subr.mxu0 0.0
    %385 = vmatpush1.msra.mxu0 0.0
    %386 = vmatprep.subr.mxu0 0.0
    %387 = vmatpush1.msra.mxu0 0.0
    %388 = vmatprep.subr.mxu0 0.0
    %389 = vmatpush1.msra.mxu0 0.0
    %390 = vmatprep.subr.mxu0 0.0
    %391 = vmatpush1.msra.mxu0 0.0
    %392 = vmatprep.subr.mxu0 0.0
    %393 = vmatpush1.msra.mxu0 0.0
    %394 = vmatprep.mubr.f32.mxu0 0.0
    %395 = vmatmul.mubr.f32.gmra.mrb[0].mxu0 %v329
    %v396 = vpop.f32.mrb[0].mxu0
    %v397 = vadd.f32 %v186, %v396
    %v398 = vpop.f32.mrb[0].mxu0
    %399 = vdwg.mxu0
    %v400 = vmax.f32 %v397, 0.0
    %v401 = vld [vmem:[#allocation8] sm:$0xff]
    %v402 = vld [vmem:[#allocation8 + $0x8] sm:$0xff]
    %v403 = vld [vmem:[#allocation8 + $0x10] sm:$0xff]
    %v404 = vld [vmem:[#allocation8 + $0x18] sm:$0xff]
    %v405 = vld [vmem:[#allocation8 + $0x20] sm:$0xff]
    %v406 = vld [vmem:[#allocation8 + $0x28] sm:$0xff]
    %v407 = vld [vmem:[#allocation8 + $0x30] sm:$0xff]
    %v408 = vld [vmem:[#allocation8 + $0x38] sm:$0xff]
    %v409 = vld [vmem:[#allocation8 + $0x40] sm:$0xff]
    %v410 = vld [vmem:[#allocation8 + $0x48] sm:$0xff]
    %v411 = vld [vmem:[#allocation8 + $0x50] sm:$0xff]
    %v412 = vld [vmem:[#allocation8 + $0x58] sm:$0xff]
    %v413 = vld [vmem:[#allocation8 + $0x60] sm:$0xff]
    %v414 = vld [vmem:[#allocation8 + $0x68] sm:$0xff]
    %v415 = vld [vmem:[#allocation8 + $0x70] sm:$0xff]
    %v416 = vld [vmem:[#allocation8 + $0x78] sm:$0xff]
    %v417 = vld [vmem:[%s6] sm:$0x1]
    %v419 = vlaneseq
    %v420 = vshrl.u32 %v419, 7
    %v421 = vsub.s32 0, %v420
    %v422 = vrot.slane %v417, %v421
    %424 = vmatprep.subr.mxu0 0.0
    %425 = vmatpush1.msra.mxu0 %v401
    %426 = vmatprep.subr.mxu0 0.0
    %427 = vmatpush1.msra.mxu0 %v402
    %428 = vmatprep.subr.mxu0 0.0
    %429 = vmatpush1.msra.mxu0 %v403
    %430 = vmatprep.subr.mxu0 0.0
    %431 = vmatpush1.msra.mxu0 %v404
    %432 = vmatprep.subr.mxu0 0.0
    %433 = vmatpush1.msra.mxu0 %v405
    %434 = vmatprep.subr.mxu0 0.0
    %435 = vmatpush1.msra.mxu0 %v406
    %436 = vmatprep.subr.mxu0 0.0
    %437 = vmatpush1.msra.mxu0 %v407
    %438 = vmatprep.subr.mxu0 0.0
    %439 = vmatpush1.msra.mxu0 %v408
    %440 = vmatprep.subr.mxu0 0.0
    %441 = vmatpush1.msra.mxu0 %v409
    %442 = vmatprep.subr.mxu0 0.0
    %443 = vmatpush1.msra.mxu0 %v410
    %444 = vmatprep.subr.mxu0 0.0
    %445 = vmatpush1.msra.mxu0 %v411
    %446 = vmatprep.subr.mxu0 0.0
    %447 = vmatpush1.msra.mxu0 %v412
    %448 = vmatprep.subr.mxu0 0.0
    %449 = vmatpush1.msra.mxu0 %v413
    %450 = vmatprep.subr.mxu0 0.0
    %451 = vmatpush1.msra.mxu0 %v414
    %452 = vmatprep.subr.mxu0 0.0
    %453 = vmatpush1.msra.mxu0 %v415
    %454 = vmatprep.subr.mxu0 0.0
    %455 = vmatpush1.msra.mxu0 %v416
    %456 = vmatprep.subr.mxu0 0.0
    %457 = vmatpush1.msra.mxu0 0.0
    %458 = vmatprep.subr.mxu0 0.0
    %459 = vmatpush1.msra.mxu0 0.0
    %460 = vmatprep.subr.mxu0 0.0
    %461 = vmatpush1.msra.mxu0 0.0
    %462 = vmatprep.subr.mxu0 0.0
    %463 = vmatpush1.msra.mxu0 0.0
    %464 = vmatprep.subr.mxu0 0.0
    %465 = vmatpush1.msra.mxu0 0.0
    %466 = vmatprep.subr.mxu0 0.0
    %467 = vmatpush1.msra.mxu0 0.0
    %468 = vmatprep.subr.mxu0 0.0
    %469 = vmatpush1.msra.mxu0 0.0
    %470 = vmatprep.subr.mxu0 0.0
    %471 = vmatpush1.msra.mxu0 0.0
    %472 = vmatprep.subr.mxu0 0.0
    %473 = vmatpush1.msra.mxu0 0.0
    %474 = vmatprep.subr.mxu0 0.0
    %475 = vmatpush1.msra.mxu0 0.0
    %476 = vmatprep.subr.mxu0 0.0
    %477 = vmatpush1.msra.mxu0 0.0
    %478 = vmatprep.subr.mxu0 0.0
    %479 = vmatpush1.msra.mxu0 0.0
    %480 = vmatprep.subr.mxu0 0.0
    %481 = vmatpush1.msra.mxu0 0.0
    %482 = vmatprep.subr.mxu0 0.0
    %483 = vmatpush1.msra.mxu0 0.0
    %484 = vmatprep.subr.mxu0 0.0
    %485 = vmatpush1.msra.mxu0 0.0
    %486 = vmatprep.subr.mxu0 0.0
    %487 = vmatpush1.msra.mxu0 0.0
    %488 = vmatprep.mubr.f32.mxu0 0.0
    %489 = vmatmul.mubr.f32.gmra.mrb[0].mxu0 %v400
    %v490 = vpop.f32.mrb[0].mxu0
    %v491 = vadd.f32 %v422, %v490
    %v492 = vpop.f32.mrb[0].mxu0
    %493 = vdwg.mxu0
    %494 = vst [vmem:[#allocation10] sm:$0xf] %v491
    // Predicated region
    $region46: #{fwd.1} parent=1 // pred_check
      _
    $region47: #{fwd.1} parent=1 // pred_check_branch
      %496 = sbr.rel (0) target = $region49
    $region48: #{fwd.1} parent=1 // pred_region
      %s498 = ssub.s32 64, 64
      %499 = vsyncadd [#allocation4], %s498
      %s501 = sshll.u32 [#allocation10], 4
      %s502 = int_to_ptr.vmem [resolvable:$true] %s501
      %504 = dma.vmem_to_hbm [thread:$0]  %s502, 64, %s7, [#allocation4]
    $region49: #{fwd.1} parent=1 // pred_fallthru
      _
    // Predicated region
    $region50: #{fwd.1} parent=1 // pred_check
      _
    $region51: #{fwd.1} parent=1 // pred_check_branch
      %506 = sbr.rel (0) target = $region53
    $region52: #{fwd.1} parent=1 // pred_region
      %507 = dma.done [#allocation4], 64
    $region53: #{fwd.1} parent=1 // pred_fallthru
      _
    %508 = vsyncpa [#allocation3], 1
    %509 = vsyncpa [#allocation6], 1
    %510 = vsyncpa [#allocation9], 1
    %511 = vsyncpa [#allocation4], 1

</llo_original>
